<compile_context>
chip_gen: v5e
topology: v5e:2x2
jax: 0.10.0
libtpu: 0.0.40
codegen_flags: <defaults>
</compile_context>

<pallas_src>
import functools

import jax
import jax.numpy as jnp
from jax.experimental import pallas as pl
from jax.experimental.pallas import tpu as pltpu

D_IN = 8                       # lin1 in_features
D_OUT = 32                     # lin1 out_features
LANE_PACK = 16                 # batch rows packed per lane group
PACKED_IN = LANE_PACK * D_IN   # 128 input lanes  (lane-dense loads)
PACKED_OUT = LANE_PACK * D_OUT # 512 output lanes (lane-dense stores)


def _round_up(a, b):
    return -(-a // b) * b


def _encoder_kernel(x_ref, w_ref, b_ref, o_ref):
    # x_ref: [rows, 128]  packed input tile (f32, cast to bf16 for the MXU)
    # w_ref: [128, 512]   block-diagonal kron(I16, W^T), bf16, resident
    # b_ref: [1, 512]     bias tiled 16x, f32, resident
    # o_ref: [rows, 512]  packed, lane-dense output tile
    y = jnp.dot(x_ref[...].astype(jnp.bfloat16), w_ref[...],
                preferred_element_type=jnp.float32)
    y = y + b_ref[...]
    o_ref[...] = jnp.maximum(y, 0.0).astype(o_ref.dtype)


@functools.partial(jax.jit,
                   static_argnames=("block_rows", "no_grid_rows", "out_dtype"))
def input_encoder(x, weight, bias, *, block_rows=2048, no_grid_rows=256,
                  out_dtype=jnp.bfloat16):
    """relu(x @ weight.T + bias)  ==  F.relu(nn.Linear(8, 32)(x)).

    x:      [B, 8]  float32
    weight: [32, 8] float32 (PyTorch nn.Linear layout [out_features, in_features])
    bias:   [32]    float32
    returns [B, 32] out_dtype (bf16 recommended; pass jnp.float32 for exact
            PyTorch dtype parity)

    block_rows / no_grid_rows are in *packed* rows (1 packed row = 16 batch rows).
    """
    B, d_in = x.shape
    assert d_in == D_IN and weight.shape == (D_OUT, D_IN) and bias.shape == (D_OUT,)
    assert block_rows > 0 and block_rows % 16 == 0  # bf16 output sublane packing

    # Block-diagonal packed weight & tiled bias (built once, resident in VMEM).
    # Weight is pre-cast to bf16 on the host (single MXU pass, half the bytes).
    w_blk = jnp.kron(jnp.eye(LANE_PACK, dtype=jnp.float32),
                     weight.T.astype(jnp.float32)).astype(jnp.bfloat16)   # [128, 512]
    b_blk = jnp.tile(bias.astype(jnp.float32), LANE_PACK).reshape(1, PACKED_OUT)

    rows_min = -(-B // LANE_PACK)          # packed rows actually needed

    if rows_min <= no_grid_rows:
        # Small / medium batch: whole arrays in VMEM, no grid, no pipeline.
        # (In a real model this branch should be fused with its consumer.)
        rows = _round_up(rows_min, 16)
        bm = rows
        grid_blocks = None
    else:
        # Large batch: 1-D batch grid streams x / y tiles while weight & bias
        # stay resident.  Guarantee >=2 grid steps so "parallel" can shard the
        # batch axis across both v7x TensorCores.
        bm = min(block_rows, _round_up(-(-rows_min // 2), 16))
        rows = _round_up(rows_min, bm)
        grid_blocks = rows // bm

    # Pad the batch so the packed view tiles exactly (padded rows are sliced
    # off before returning; they only ever hold relu(bias) garbage).
    b_pad = rows * LANE_PACK
    if b_pad != B:
        x = jnp.pad(x, ((0, b_pad - B), (0, 0)))
    xp = x.reshape(rows, PACKED_IN)        # free, row-major view

    out_shape = jax.ShapeDtypeStruct((rows, PACKED_OUT), out_dtype)
    out_itemsize = jnp.dtype(out_dtype).itemsize

    if grid_blocks is None:
        yp = pl.pallas_call(_encoder_kernel, out_shape=out_shape)(xp, w_blk, b_blk)
    else:
        # Double-buffered x + out tiles, resident weight & bias.
        vmem_bytes = (2 * bm * PACKED_IN * 4
                      + 2 * bm * PACKED_OUT * out_itemsize
                      + w_blk.size * 2 + b_blk.size * 4)
        vmem_limit = min(64 * 1024 * 1024,
                         max(32 * 1024 * 1024, int(vmem_bytes * 5 // 4)))
        cost = pl.CostEstimate(
            flops=2 * rows * PACKED_IN * PACKED_OUT,
            transcendentals=0,
            bytes_accessed=(rows * PACKED_IN * 4
                            + rows * PACKED_OUT * out_itemsize
                            + w_blk.size * 2 + b_blk.size * 4),
        )
        yp = pl.pallas_call(
            _encoder_kernel,
            out_shape=out_shape,
            grid=(grid_blocks,),
            in_specs=[
                pl.BlockSpec((bm, PACKED_IN), lambda i: (i, 0)),
                pl.BlockSpec((PACKED_IN, PACKED_OUT), lambda i: (0, 0)),
                pl.BlockSpec((1, PACKED_OUT), lambda i: (0, 0)),
            ],
            out_specs=pl.BlockSpec((bm, PACKED_OUT), lambda i: (i, 0)),
            compiler_params=pltpu.CompilerParams(
                dimension_semantics=("parallel",),
                vmem_limit_bytes=vmem_limit),
            cost_estimate=cost,
        )(xp, w_blk, b_blk)

    # Unpack lanes back to [B, 32] (free, row-major) and drop padding rows.
    return yp.reshape(b_pad, D_OUT)[:B]


if __name__ == "__main__":
    key = jax.random.PRNGKey(0)
    kx, kw, kb, kx2 = jax.random.split(key, 4)

    # Small shapes consistent with the module: batch=8, in=8, out=32.
    B = 8
    x = jax.random.normal(kx, (B, D_IN), dtype=jnp.float32)
    # Mimic nn.Linear's uniform(-1/sqrt(fan_in), 1/sqrt(fan_in)) init.
    bound = 1.0 / jnp.sqrt(jnp.float32(D_IN))
    weight = jax.random.uniform(kw, (D_OUT, D_IN), jnp.float32, -bound, bound)
    bias = jax.random.uniform(kb, (D_OUT,), jnp.float32, -bound, bound)

    ref = jnp.maximum(x @ weight.T + bias[None, :], 0.0)

    # Path 1: small batch, no-grid, bf16 output (recommended default).
    out = jax.block_until_ready(input_encoder(x, weight, bias))
    assert out.shape == (B, D_OUT) and out.dtype == jnp.bfloat16
    assert jnp.allclose(out.astype(jnp.float32), ref, atol=5e-2, rtol=3e-2)

    # Path 1b: explicit f32 output (PyTorch dtype parity; bf16 MXU inputs only).
    out_f32 = jax.block_until_ready(
        input_encoder(x, weight, bias, out_dtype=jnp.float32))
    assert out_f32.shape == (B, D_OUT) and out_f32.dtype == jnp.float32
    assert jnp.allclose(out_f32, ref, atol=5e-2, rtol=1e-2)

    # Path 2: exercise the batch-tiled streaming path (>=2 grid steps) cheaply
    # by lowering the thresholds.
    B2 = 512
    x2 = jax.random.normal(kx2, (B2, D_IN), dtype=jnp.float32)
    out2 = jax.block_until_ready(
        input_encoder(x2, weight, bias, block_rows=16, no_grid_rows=0))
    ref2 = jnp.maximum(x2 @ weight.T + bias[None, :], 0.0)
    assert out2.shape == (B2, D_OUT)
    assert jnp.allclose(out2.astype(jnp.float32), ref2, atol=5e-2, rtol=3e-2)

    print("KERNEL_OK")
</pallas_src>

<mosaic_0001>
module attributes {stable_mosaic.version = 11 : i64} {
  func.func @_encoder_kernel(%arg0: memref<16x128xf32, #tpu.memory_space<vmem>>, %arg1: memref<128x512xbf16, #tpu.memory_space<vmem>>, %arg2: memref<1x512xf32, #tpu.memory_space<vmem>>, %arg3: memref<16x512xbf16, #tpu.memory_space<vmem>>) attributes {dimension_semantics = [], scalar_prefetch = 0 : i64, scratch_operands = 0 : i64, tpu.core_type = #tpu.core_type<tc>} {
    %c0 = arith.constant 0 : index
    %c0_0 = arith.constant 0 : index
    %0 = vector.load %arg0[%c0, %c0_0] : memref<16x128xf32, #tpu.memory_space<vmem>>, vector<16x128xf32>
    %1 = arith.truncf %0 : vector<16x128xf32> to vector<16x128xbf16>
    %c0_1 = arith.constant 0 : index
    %c0_2 = arith.constant 0 : index
    %2 = vector.load %arg1[%c0_1, %c0_2] : memref<128x512xbf16, #tpu.memory_space<vmem>>, vector<128x512xbf16>
    %cst = arith.constant dense<0.000000e+00> : vector<16x512xf32>
    %3 = tpu.matmul %1, %2, %cst {dimension_numbers = #tpu.dot_dimension_numbers<[1], [0], [0], [1], [0, 0, 1, 1], [], []>} : vector<16x128xbf16>, vector<128x512xbf16>, vector<16x512xf32> -> vector<16x512xf32>
    %c0_3 = arith.constant 0 : index
    %c0_4 = arith.constant 0 : index
    %4 = vector.load %arg2[%c0_3, %c0_4] : memref<1x512xf32, #tpu.memory_space<vmem>>, vector<1x512xf32>
    %5 = vector.broadcast %4 : vector<1x512xf32> to vector<16x512xf32>
    %6 = arith.addf %3, %5 : vector<16x512xf32>
    %cst_5 = arith.constant 0.000000e+00 : f32
    %7 = vector.broadcast %cst_5 : f32 to vector<16x512xf32>
    %8 = arith.maximumf %6, %7 : vector<16x512xf32>
    %9 = arith.truncf %8 : vector<16x512xf32> to vector<16x512xbf16>
    %c0_6 = arith.constant 0 : index
    %c0_7 = arith.constant 0 : index
    %10 = vector.load %arg3[%c0_6, %c0_7] : memref<16x512xbf16, #tpu.memory_space<vmem>>, vector<16x512xbf16>
    tpu.vector_store %arg3[%c0_6, %c0_7], %9 {strides = array<i32>} : memref<16x512xbf16, #tpu.memory_space<vmem>>, vector<16x512xbf16>,
    return
  }
}

</mosaic_0001>

<llo_original>
// kernel: tile.8
$region0: #{tile.8}
  #allocation0 [shape = 's32[1]{0}', space=sflag, size = 0x4, scoped, tag = 'scoped memory for tile.8']
  %s0 = inlined_call_operand.vmem [shape: f32[32], index: 0, kind: input, shape index: {}]
  %s1 = inlined_call_operand.vmem [shape: f32[16,32], index: 1, kind: output, shape index: {}]
  // Predicated region
  $region2: #{tile.8} parent=0 // pred_check
    _
  $region3: #{tile.8} parent=0 // pred_check_branch
    %3 = sbr.rel (0) target = $region5
  $region4: #{tile.8} parent=0 // pred_region
    _
  $region5: #{tile.8} parent=0 // pred_fallthru
    _
  %v4 = vld [vmem:[%s0] ss:$0 sm:$0xff]
  %5 = vst [vmem:[%s1] sm:$0xff] %v4
  %s6 = scalar_lea.vmem %s1, 8
  %7 = vst [vmem:[%s6] sm:$0xff] %v4

// kernel: tile.9
$region0: #{tile.9}
  %s0 = inlined_call_operand.vmem [shape: f32[16,32], index: 0, kind: input, shape index: {}]
  %s1 = inlined_call_operand.vmem [shape: f32[1,512], index: 1, kind: output, shape index: {}]
  $region1: #{tile.9} parent=0
    #allocation0 [shape = 'u8[16384]{0}', space=vmem, size = 0x4000, scoped, tag = 'scoped mem for output reshape']
    %v2 = vld [vmem:[%s0] ss:$4 sm:$0xf]
    %vm3 = vcmask 261120
    %4 = vst.msk [vmem:[#allocation0] ss:$8 sm:$0xf] %vm3, %v2
    %s5 = scalar_lea.vmem %s0, 3
    %v6 = vld [vmem:[%s5] ss:$4 sm:$0xf]
    %7 = vrot.lane.b32.xlu0 %v6, 96
    %v8 = vpop.permute.xlu0 %7
    %vm9 = vcmask 1048320
    %10 = vst.msk [vmem:[#allocation0] ss:$8 sm:$0xf] %vm9, %v8
    %s11 = scalar_lea.vmem %s0, 2
    %v12 = vld [vmem:[%s11] ss:$4 sm:$0xf]
    %13 = vrot.lane.b32.xlu0 %v12, 64
    %v14 = vpop.permute.xlu0 %13
    %vm15 = vcmask 785920
    %16 = vst.msk [vmem:[#allocation0] ss:$8 sm:$0xf] %vm15, %v14
    %s17 = scalar_lea.vmem %s0, 1
    %v18 = vld [vmem:[%s17] ss:$4 sm:$0xf]
    %19 = vrot.lane.b32.xlu0 %v18, 32
    %v20 = vpop.permute.xlu0 %19
    %vm21 = vcmask 523520
    %22 = vst.msk [vmem:[#allocation0] ss:$8 sm:$0xf] %vm21, %v20
    %s24 = ssub.s32 2, 1
    %v25 = vld [vmem:[#allocation0] sm:%s24]
    %s27 = ssub.s32 2, 1
    %28 = vst [vmem:[%s1] sm:%s27] %v25
    %s29 = scalar_lea.vmem [#allocation0], 8
    %v30 = vld [vmem:[%s29] sm:%s24]
    %s32 = ssub.s32 2, 1
    %s33 = scalar_lea.vmem %s1, 1
    %34 = vst [vmem:[%s33] sm:%s32] %v30
    %s35 = scalar_lea.vmem [#allocation0], 16
    %v36 = vld [vmem:[%s35] sm:%s24]
    %s38 = ssub.s32 2, 1
    %s39 = scalar_lea.vmem %s1, 2
    %40 = vst [vmem:[%s39] sm:%s38] %v36
    %s41 = scalar_lea.vmem [#allocation0], 24
    %v42 = vld [vmem:[%s41] sm:%s24]
    %s44 = ssub.s32 2, 1
    %s45 = scalar_lea.vmem %s1, 3
    %46 = vst [vmem:[%s45] sm:%s44] %v42

// kernel: input_encoder.1
$region0: #{input_encoder.1}
  #allocation0 [shape = 'u32[]', space=smem, size = 0x4, offset = 0x4, fixed_abs, tag = 'smem constant byte address 0x4 - core index']
  #allocation1 [shape = 'u32[72,128]{1,0:T(1,128)}', space=vmem, size = 0x9000, scoped, tag = 'internal scratch']
  %s0 = inlined_call_operand.vmem [shape: f32[16,128], index: 0, kind: input, shape index: {}]
  %s1 = inlined_call_operand.vmem [shape: bf16[128,512], index: 1, kind: input, shape index: {}]
  %s2 = inlined_call_operand.vmem [shape: f32[1,512], index: 2, kind: input, shape index: {}]
  %s3 = inlined_call_operand.vmem [shape: bf16[16,512], index: 3, kind: output, shape index: {}]
  %s4 = sld [smem:[#allocation0]]
  $region22: #{input_encoder.1} parent=0
    _
  %s6 = ssub.s32 1, %s4
  %s7 = scalar_select 0, %s6, %s4
  // Predicated region
  $region2: #{input_encoder.1} parent=0 // pred_check
    _
  $region3: #{input_encoder.1} parent=0 // pred_check_branch
    %9 = sbr.rel (0) target = $region5
  $region4: #{input_encoder.1} parent=0 // pred_region
    _
  $region5: #{input_encoder.1} parent=0 // pred_fallthru
    _
  // Predicated region
  $region6: #{input_encoder.1} parent=0 // pred_check
    _
  $region7: #{input_encoder.1} parent=0 // pred_check_branch
    %11 = sbr.rel (0) target = $region9
  $region8: #{input_encoder.1} parent=0 // pred_region
    _
  $region9: #{input_encoder.1} parent=0 // pred_fallthru
    _
  // Predicated region
  $region10: #{input_encoder.1} parent=0 // pred_check
    _
  $region11: #{input_encoder.1} parent=0 // pred_check_branch
    %13 = sbr.rel (0) target = $region13
  $region12: #{input_encoder.1} parent=0 // pred_region
    _
  $region13: #{input_encoder.1} parent=0 // pred_fallthru
    _
  %v14 = vld [vmem:[%s0] sm:$0xff]
  %v15 = vld [vmem:[%s0 + $0x8] sm:$0xff]
  %v16 = vpack.c.bf16 %v15, %v14
  %v17 = vld [vmem:[%s1] sm:$0xff]
  %v18 = vld [vmem:[%s1 + $0x8] sm:$0xff]
  %v19 = vld [vmem:[%s1 + $0x10] sm:$0xff]
  %v20 = vld [vmem:[%s1 + $0x18] sm:$0xff]
  %v21 = vld [vmem:[%s1 + $0x20] sm:$0xff]
  %v22 = vld [vmem:[%s1 + $0x28] sm:$0xff]
  %v23 = vld [vmem:[%s1 + $0x30] sm:$0xff]
  %v24 = vld [vmem:[%s1 + $0x38] sm:$0xff]
  %v25 = vld [vmem:[%s1 + $0x40] sm:$0xff]
  %v26 = vld [vmem:[%s1 + $0x48] sm:$0xff]
  %v27 = vld [vmem:[%s1 + $0x50] sm:$0xff]
  %v28 = vld [vmem:[%s1 + $0x58] sm:$0xff]
  %v29 = vld [vmem:[%s1 + $0x60] sm:$0xff]
  %v30 = vld [vmem:[%s1 + $0x68] sm:$0xff]
  %v31 = vld [vmem:[%s1 + $0x70] sm:$0xff]
  %v32 = vld [vmem:[%s1 + $0x78] sm:$0xff]
  %v33 = vld [vmem:[%s1 + $0x80] sm:$0xff]
  %v34 = vld [vmem:[%s1 + $0x88] sm:$0xff]
  %v35 = vld [vmem:[%s1 + $0x90] sm:$0xff]
  %v36 = vld [vmem:[%s1 + $0x98] sm:$0xff]
  %v37 = vld [vmem:[%s1 + $0xa0] sm:$0xff]
  %v38 = vld [vmem:[%s1 + $0xa8] sm:$0xff]
  %v39 = vld [vmem:[%s1 + $0xb0] sm:$0xff]
  %v40 = vld [vmem:[%s1 + $0xb8] sm:$0xff]
  %v41 = vld [vmem:[%s1 + $0xc0] sm:$0xff]
  %v42 = vld [vmem:[%s1 + $0xc8] sm:$0xff]
  %v43 = vld [vmem:[%s1 + $0xd0] sm:$0xff]
  %v44 = vld [vmem:[%s1 + $0xd8] sm:$0xff]
  %v45 = vld [vmem:[%s1 + $0xe0] sm:$0xff]
  %v46 = vld [vmem:[%s1 + $0xe8] sm:$0xff]
  %v47 = vld [vmem:[%s1 + $0xf0] sm:$0xff]
  %v48 = vld [vmem:[%s1 + $0xf8] sm:$0xff]
  %v49 = vld [vmem:[%s2] sm:$0xf]
  %v51 = vperm.slane %v49, 0
  %v52 = vperm.slane %v49, 1
  %v53 = vperm.slane %v49, 2
  %v54 = vperm.slane %v49, 3
  %v91 = vunpack.c.l.b16 %v17
  %v92 = vunpack.c.h.b16 %v17
  %v93 = vunpack.c.l.b16 %v18
  %v94 = vunpack.c.h.b16 %v18
  %v95 = vunpack.c.l.b16 %v19
  %v96 = vunpack.c.h.b16 %v19
  %v97 = vunpack.c.l.b16 %v20
  %v98 = vunpack.c.h.b16 %v20
  %v99 = vunpack.c.l.b16 %v21
  %v100 = vunpack.c.h.b16 %v21
  %v101 = vunpack.c.l.b16 %v22
  %v102 = vunpack.c.h.b16 %v22
  %v103 = vunpack.c.l.b16 %v23
  %v104 = vunpack.c.h.b16 %v23
  %v105 = vunpack.c.l.b16 %v24
  %v106 = vunpack.c.h.b16 %v24
  %v107 = vunpack.c.l.b16 %v25
  %v108 = vunpack.c.h.b16 %v25
  %v109 = vunpack.c.l.b16 %v26
  %v110 = vunpack.c.h.b16 %v26
  %v111 = vunpack.c.l.b16 %v27
  %v112 = vunpack.c.h.b16 %v27
  %v113 = vunpack.c.l.b16 %v28
  %v114 = vunpack.c.h.b16 %v28
  %v115 = vunpack.c.l.b16 %v29
  %v116 = vunpack.c.h.b16 %v29
  %v117 = vunpack.c.l.b16 %v30
  %v118 = vunpack.c.h.b16 %v30
  %v119 = vunpack.c.l.b16 %v31
  %v120 = vunpack.c.h.b16 %v31
  %v121 = vunpack.c.l.b16 %v32
  %v122 = vunpack.c.h.b16 %v32
  %v123 = vunpack.c.l.b16 %v33
  %v124 = vunpack.c.h.b16 %v33
  %v125 = vunpack.c.l.b16 %v34
  %v126 = vunpack.c.h.b16 %v34
  %v127 = vunpack.c.l.b16 %v35
  %v128 = vunpack.c.h.b16 %v35
  %v129 = vunpack.c.l.b16 %v36
  %v130 = vunpack.c.h.b16 %v36
  %v131 = vunpack.c.l.b16 %v37
  %v132 = vunpack.c.h.b16 %v37
  %v133 = vunpack.c.l.b16 %v38
  %v134 = vunpack.c.h.b16 %v38
  %v135 = vunpack.c.l.b16 %v39
  %v136 = vunpack.c.h.b16 %v39
  %v137 = vunpack.c.l.b16 %v40
  %v138 = vunpack.c.h.b16 %v40
  %v139 = vunpack.c.l.b16 %v41
  %v140 = vunpack.c.h.b16 %v41
  %v141 = vunpack.c.l.b16 %v42
  %v142 = vunpack.c.h.b16 %v42
  %v143 = vunpack.c.l.b16 %v43
  %v144 = vunpack.c.h.b16 %v43
  %v145 = vunpack.c.l.b16 %v44
  %v146 = vunpack.c.h.b16 %v44
  %v147 = vunpack.c.l.b16 %v45
  %v148 = vunpack.c.h.b16 %v45
  %v149 = vunpack.c.l.b16 %v46
  %v150 = vunpack.c.h.b16 %v46
  %v151 = vunpack.c.l.b16 %v47
  %v152 = vunpack.c.h.b16 %v47
  %v153 = vunpack.c.l.b16 %v48
  %v154 = vunpack.c.h.b16 %v48
  %v155 = vpack.c.b16 %v95, %v91
  %v156 = vpack.c.b16 %v96, %v92
  %v157 = vpack.c.b16 %v97, %v93
  %v158 = vpack.c.b16 %v98, %v94
  %v159 = vpack.c.b16 %v103, %v99
  %v160 = vpack.c.b16 %v104, %v100
  %v161 = vpack.c.b16 %v105, %v101
  %v162 = vpack.c.b16 %v106, %v102
  %v163 = vpack.c.b16 %v111, %v107
  %v164 = vpack.c.b16 %v112, %v108
  %v165 = vpack.c.b16 %v113, %v109
  %v166 = vpack.c.b16 %v114, %v110
  %v167 = vpack.c.b16 %v119, %v115
  %v168 = vpack.c.b16 %v120, %v116
  %v169 = vpack.c.b16 %v121, %v117
  %v170 = vpack.c.b16 %v122, %v118
  %v171 = vpack.c.b16 %v127, %v123
  %v172 = vpack.c.b16 %v128, %v124
  %v173 = vpack.c.b16 %v129, %v125
  %v174 = vpack.c.b16 %v130, %v126
  %v175 = vpack.c.b16 %v135, %v131
  %v176 = vpack.c.b16 %v136, %v132
  %v177 = vpack.c.b16 %v137, %v133
  %v178 = vpack.c.b16 %v138, %v134
  %v179 = vpack.c.b16 %v143, %v139
  %v180 = vpack.c.b16 %v144, %v140
  %v181 = vpack.c.b16 %v145, %v141
  %v182 = vpack.c.b16 %v146, %v142
  %v183 = vpack.c.b16 %v151, %v147
  %v184 = vpack.c.b16 %v152, %v148
  %v185 = vpack.c.b16 %v153, %v149
  %v186 = vpack.c.b16 %v154, %v150
  %219 = vmatpush.bf16.msra.mxu0 %v183
  %220 = vmatpush.bf16.msra.mxu0 %v179
  %221 = vmatpush.bf16.msra.mxu0 %v175
  %222 = vmatpush.bf16.msra.mxu0 %v171
  %223 = vmatpush.bf16.msra.mxu0 %v167
  %224 = vmatpush.bf16.msra.mxu0 %v163
  %225 = vmatpush.bf16.msra.mxu0 %v159
  %226 = vmatpush.bf16.msra.mxu0 %v155
  %227 = vmatmul.bf16.gmra.mxu0 %v16
  %v228 = vpop.f32.mrf.mxu0
  %v229 = vadd.f32 %v51, %v228
  %v230 = vpop.f32.mrf.mxu0
  %v231 = vadd.f32 %v51, %v230
  %232 = vdwg.mxu0
  %233 = vmatpush.bf16.msra.mxu0 %v184
  %234 = vmatpush.bf16.msra.mxu0 %v180
  %235 = vmatpush.bf16.msra.mxu0 %v176
  %236 = vmatpush.bf16.msra.mxu0 %v172
  %237 = vmatpush.bf16.msra.mxu0 %v168
  %238 = vmatpush.bf16.msra.mxu0 %v164
  %239 = vmatpush.bf16.msra.mxu0 %v160
  %240 = vmatpush.bf16.msra.mxu0 %v156
  %241 = vmatmul.bf16.gmra.mxu0 %v16
  %v242 = vpop.f32.mrf.mxu0
  %v243 = vadd.f32 %v52, %v242
  %v244 = vpop.f32.mrf.mxu0
  %v245 = vadd.f32 %v52, %v244
  %246 = vdwg.mxu0
  %247 = vmatpush.bf16.msra.mxu0 %v185
  %248 = vmatpush.bf16.msra.mxu0 %v181
  %249 = vmatpush.bf16.msra.mxu0 %v177
  %250 = vmatpush.bf16.msra.mxu0 %v173
  %251 = vmatpush.bf16.msra.mxu0 %v169
  %252 = vmatpush.bf16.msra.mxu0 %v165
  %253 = vmatpush.bf16.msra.mxu0 %v161
  %254 = vmatpush.bf16.msra.mxu0 %v157
  %255 = vmatmul.bf16.gmra.mxu0 %v16
  %v256 = vpop.f32.mrf.mxu0
  %v257 = vadd.f32 %v53, %v256
  %v258 = vpop.f32.mrf.mxu0
  %v259 = vadd.f32 %v53, %v258
  %260 = vdwg.mxu0
  %261 = vmatpush.bf16.msra.mxu0 %v186
  %262 = vmatpush.bf16.msra.mxu0 %v182
  %263 = vmatpush.bf16.msra.mxu0 %v178
  %264 = vmatpush.bf16.msra.mxu0 %v174
  %265 = vmatpush.bf16.msra.mxu0 %v170
  %266 = vmatpush.bf16.msra.mxu0 %v166
  %267 = vmatpush.bf16.msra.mxu0 %v162
  %268 = vmatpush.bf16.msra.mxu0 %v158
  %269 = vmatmul.bf16.gmra.mxu0 %v16
  %v270 = vpop.f32.mrf.mxu0
  %v271 = vadd.f32 %v54, %v270
  %v272 = vpop.f32.mrf.mxu0
  %v273 = vadd.f32 %v54, %v272
  %274 = vdwg.mxu0
  %v275 = vmax.f32 %v229, 0.0
  %v276 = vmax.f32 %v243, 0.0
  %v277 = vmax.f32 %v257, 0.0
  %v278 = vmax.f32 %v271, 0.0
  %v279 = vmax.f32 %v231, 0.0
  %v280 = vmax.f32 %v245, 0.0
  %v281 = vmax.f32 %v259, 0.0
  %v282 = vmax.f32 %v273, 0.0
  %v283 = vpack.c.bf16 %v276, %v275
  %v284 = vpack.c.bf16 %v278, %v277
  %v285 = vpack.c.bf16 %v280, %v279
  %v286 = vpack.c.bf16 %v282, %v281
  %287 = vst [vmem:[%s3] sm:$0xff] %v283
  %288 = vst [vmem:[%s3 + $0x8] sm:$0xff] %v284
  %289 = vst [vmem:[%s3 + $0x10] sm:$0xff] %v285
  %290 = vst [vmem:[%s3 + $0x18] sm:$0xff] %v286
  // Predicated region
  $region14: #{input_encoder.1} parent=0 // pred_check
    _
  $region15: #{input_encoder.1} parent=0 // pred_check_branch
    %292 = sbr.rel (0) target = $region17
  $region16: #{input_encoder.1} parent=0 // pred_region
    _
  $region17: #{input_encoder.1} parent=0 // pred_fallthru
    _
  // Predicated region
  $region18: #{input_encoder.1} parent=0 // pred_check
    _
  $region19: #{input_encoder.1} parent=0 // pred_check_branch
    %294 = sbr.rel (0) target = $region21
  $region20: #{input_encoder.1} parent=0 // pred_region
    _
  $region21: #{input_encoder.1} parent=0 // pred_fallthru
    _

</llo_original>
